<compile_context>
chip_gen: v7x
topology: tpu7x:2x2x1
jax: 0.10.0
libtpu: 0.0.40
codegen_flags: <defaults>
</compile_context>

<pallas_src>
import jax
import jax.numpy as jnp
from jax.experimental import pallas as pl
from jax.experimental.pallas import tpu as pltpu

INPUT_DIM = 4
HIDDEN = 128
OUTPUT_DIM = 3
PADDED_OUT = 8  # narrow lane-padded output width written by the kernel (>= OUTPUT_DIM)

# Packed small-param buffer layout (8, 128) f32:
#   rows 0..3 : w1 (4, 128)
#   row  4    : b1 (128,)
#   row  5    : b2 (128,)
#   row  6    : b3 (3 real values in lanes 0..2, rest zero)
#   row  7    : unused (zero)


def dqn_kernel(x_ref, p_ref, w2_ref, w3_ref, o_ref):
    x = x_ref[...]        # (TB, 4)   f32
    p = p_ref[...]        # (8, 128)  f32 packed small params

    # fc1: contraction dim K=4 is far too small for the MXU -> 4 VPU broadcast FMAs.
    h1 = p[4:5, :] + x[:, 0:1] * p[0:1, :]
    h1 = h1 + x[:, 1:2] * p[1:2, :]
    h1 = h1 + x[:, 2:3] * p[2:3, :]
    h1 = h1 + x[:, 3:4] * p[3:4, :]
    h1 = jnp.maximum(h1, 0.0)                                   # (TB, 128) f32

    # fc2: bf16 MXU matmul with f32 accumulation; bias / ReLU stay f32 (v5e-safe).
    h2 = jnp.dot(h1.astype(jnp.bfloat16), w2_ref[...],
                 preferred_element_type=jnp.float32) + p[5:6, :]
    h2 = jnp.maximum(h2, 0.0)                                   # (TB, 128) f32

    # fc3: only 8 (of which 3 useful) output columns -> keep it in f32 so near-tied Q-values
    # keep their exact argmax; the matmul is tiny so f32 on the MXU is essentially free here.
    out = jnp.dot(h2, w3_ref[...], preferred_element_type=jnp.float32)
    o_ref[...] = out + p[6:7, 0:PADDED_OUT]                     # (TB, 8) narrow store


def _tile_rows(batch, *, tb_max=1024, min_steps=2):
    """Pick (tile_rows, padded_rows).

    Rounds the batch up to a sublane multiple (8), then aims for at least `min_steps` grid
    steps (so v7x can shard the parallel batch axis across both TensorCores) while capping the
    tile at `tb_max` rows to amortize the ~0.35us per-step pipeline overhead on huge batches.
    """
    rows = max(8, -(-batch // 8) * 8)
    if rows <= 8:
        tb = 8
    else:
        tb = -(-(rows // min_steps) // 8) * 8   # ~rows/min_steps, rounded up to a multiple of 8
        tb = max(8, min(tb, tb_max))
    padded = -(-rows // tb) * tb
    return tb, padded


def dqn_forward(x, kernel_params, *, tb_max=1024):
    """x: (batch, 4) f32. Returns (batch, OUTPUT_DIM) f32 Q-values."""
    packed, w2, w3p = kernel_params
    batch = x.shape[0]

    tb, padded = _tile_rows(batch, tb_max=tb_max)
    if padded != batch:
        x = jnp.pad(x, ((0, padded - batch), (0, 0)))
    grid = (padded // tb,)

    def const(shape):
        # Grid-invariant block: same block index every step -> stays VMEM-resident.
        return pl.BlockSpec(shape, lambda i: (0,) * len(shape))

    out = pl.pallas_call(
        dqn_kernel,
        out_shape=jax.ShapeDtypeStruct((padded, PADDED_OUT), jnp.float32),
        grid=grid,
        in_specs=[
            pl.BlockSpec((tb, INPUT_DIM), lambda i: (i, 0)),  # x tile, pipelined over batch
            const(packed.shape),                              # packed w1/b1/b2/b3 (f32)
            const(w2.shape),                                  # fc2 weight (bf16)
            const(w3p.shape),                                 # fc3 weight, 8 cols (f32)
        ],
        out_specs=pl.BlockSpec((tb, PADDED_OUT), lambda i: (i, 0)),
        compiler_params=pltpu.CompilerParams(
            dimension_semantics=("parallel",)),
    )(x, packed, w2, w3p)

    # Narrow (padded, 8) slab -> the real (batch, 3) Q-values; slice is now trivial traffic.
    return out[:batch, :OUTPUT_DIM]


def init_params(key):
    # Deterministic synthetic init (PyTorch-style uniform(-1/sqrt(fan_in), 1/sqrt(fan_in))).
    keys = jax.random.split(key, 6)

    def linear(kw, kb, fan_in, fan_out):
        bound = 1.0 / jnp.sqrt(fan_in)
        w = jax.random.uniform(kw, (fan_in, fan_out), jnp.float32, -bound, bound)
        b = jax.random.uniform(kb, (1, fan_out), jnp.float32, -bound, bound)
        return w, b

    w1, b1 = linear(keys[0], keys[1], INPUT_DIM, HIDDEN)
    w2, b2 = linear(keys[2], keys[3], HIDDEN, HIDDEN)
    w3, b3 = linear(keys[4], keys[5], HIDDEN, OUTPUT_DIM)
    return (w1, b1, w2, b2, w3, b3)


def prepare_kernel_params(params):
    """Kernel-side layout: small f32 params packed into one buffer; fc2 in bf16; fc3 8-wide f32."""
    w1, b1, w2, b2, w3, b3 = params
    packed = jnp.zeros((8, HIDDEN), jnp.float32)
    packed = packed.at[0:INPUT_DIM, :].set(w1)
    packed = packed.at[4, :].set(b1[0])
    packed = packed.at[5, :].set(b2[0])
    packed = packed.at[6, :OUTPUT_DIM].set(b3[0])
    w3p = jnp.zeros((HIDDEN, PADDED_OUT), jnp.float32).at[:, :OUTPUT_DIM].set(w3)
    return (packed, w2.astype(jnp.bfloat16), w3p)


def dqn_reference(x, params):
    w1, b1, w2, b2, w3, b3 = params
    h1 = jnp.maximum(x @ w1 + b1, 0.0)
    h2 = jnp.maximum(h1 @ w2 + b2, 0.0)
    return h2 @ w3 + b3


if __name__ == "__main__":
    key = jax.random.PRNGKey(0)
    k_param, k_x1, k_x2 = jax.random.split(key, 3)
    params = init_params(k_param)
    kparams = prepare_kernel_params(params)

    # Small batch (typical DQN action-selection): single grid step, 8-wide masked output store.
    x_small = jax.random.normal(k_x1, (8, INPUT_DIM), jnp.float32)
    out_small = jax.block_until_ready(dqn_forward(x_small, kparams))
    ref_small = dqn_reference(x_small, params)
    assert out_small.shape == (8, OUTPUT_DIM)
    # fc2 runs on bf16 MXU operands -> relaxed tolerance vs. the f32 reference.
    assert jnp.max(jnp.abs(out_small - ref_small)) < 5e-2

    # Larger ragged batch: pads 300 -> 304 rows, 2 parallel grid steps (both v7x TCs usable).
    x_big = jax.random.normal(k_x2, (300, INPUT_DIM), jnp.float32)
    out_big = jax.block_until_ready(dqn_forward(x_big, kparams))
    ref_big = dqn_reference(x_big, params)
    assert out_big.shape == (300, OUTPUT_DIM)
    assert jnp.max(jnp.abs(out_big - ref_big)) < 5e-2

    print("KERNEL_OK")
</pallas_src>

<mosaic_0001>
module attributes {stable_mosaic.version = 11 : i64} {
  func.func @dqn_kernel(%arg0: i32, %arg1: memref<8x4xf32, #tpu.memory_space<vmem>>, %arg2: memref<8x128xf32, #tpu.memory_space<vmem>>, %arg3: memref<128x128xbf16, #tpu.memory_space<vmem>>, %arg4: memref<128x8xf32, #tpu.memory_space<vmem>>, %arg5: memref<8x8xf32, #tpu.memory_space<vmem>>) attributes {dimension_semantics = [#tpu.dimension_semantics<parallel>], iteration_bounds = array<i64: 1>, scalar_prefetch = 0 : i64, scratch_operands = 0 : i64, tpu.core_type = #tpu.core_type<tc>, window_params = [{transform_indices = @transform_0, window_bounds = array<i64: 8, 4>}, {pipeline_mode = #tpu.pipeline_mode<synchronous>, transform_indices = @transform_1, window_bounds = array<i64: 8, 128>}, {pipeline_mode = #tpu.pipeline_mode<synchronous>, transform_indices = @transform_2, window_bounds = array<i64: 128, 128>}, {pipeline_mode = #tpu.pipeline_mode<synchronous>, transform_indices = @transform_3, window_bounds = array<i64: 128, 8>}, {transform_indices = @transform_4, window_bounds = array<i64: 8, 8>}]} {
    %c0 = arith.constant 0 : index
    %c0_0 = arith.constant 0 : index
    %0 = vector.load %arg1[%c0, %c0_0] : memref<8x4xf32, #tpu.memory_space<vmem>>, vector<8x4xf32>
    %c0_1 = arith.constant 0 : index
    %c0_2 = arith.constant 0 : index
    %1 = vector.load %arg2[%c0_1, %c0_2] : memref<8x128xf32, #tpu.memory_space<vmem>>, vector<8x128xf32>
    %2 = vector.extract_strided_slice %1 {offsets = [4, 0], sizes = [1, 128], strides = [1, 1]} : vector<8x128xf32> to vector<1x128xf32>
    %3 = vector.extract_strided_slice %0 {offsets = [0, 0], sizes = [8, 1], strides = [1, 1]} : vector<8x4xf32> to vector<8x1xf32>
    %4 = vector.extract_strided_slice %1 {offsets = [0, 0], sizes = [1, 128], strides = [1, 1]} : vector<8x128xf32> to vector<1x128xf32>
    %5 = vector.broadcast %3 : vector<8x1xf32> to vector<8x128xf32>
    %6 = vector.broadcast %4 : vector<1x128xf32> to vector<8x128xf32>
    %7 = arith.mulf %5, %6 : vector<8x128xf32>
    %8 = vector.broadcast %2 : vector<1x128xf32> to vector<8x128xf32>
    %9 = arith.addf %8, %7 : vector<8x128xf32>
    %10 = vector.extract_strided_slice %0 {offsets = [0, 1], sizes = [8, 1], strides = [1, 1]} : vector<8x4xf32> to vector<8x1xf32>
    %11 = vector.extract_strided_slice %1 {offsets = [1, 0], sizes = [1, 128], strides = [1, 1]} : vector<8x128xf32> to vector<1x128xf32>
    %12 = vector.broadcast %10 : vector<8x1xf32> to vector<8x128xf32>
    %13 = vector.broadcast %11 : vector<1x128xf32> to vector<8x128xf32>
    %14 = arith.mulf %12, %13 : vector<8x128xf32>
    %15 = arith.addf %9, %14 : vector<8x128xf32>
    %16 = vector.extract_strided_slice %0 {offsets = [0, 2], sizes = [8, 1], strides = [1, 1]} : vector<8x4xf32> to vector<8x1xf32>
    %17 = vector.extract_strided_slice %1 {offsets = [2, 0], sizes = [1, 128], strides = [1, 1]} : vector<8x128xf32> to vector<1x128xf32>
    %18 = vector.broadcast %16 : vector<8x1xf32> to vector<8x128xf32>
    %19 = vector.broadcast %17 : vector<1x128xf32> to vector<8x128xf32>
    %20 = arith.mulf %18, %19 : vector<8x128xf32>
    %21 = arith.addf %15, %20 : vector<8x128xf32>
    %22 = vector.extract_strided_slice %0 {offsets = [0, 3], sizes = [8, 1], strides = [1, 1]} : vector<8x4xf32> to vector<8x1xf32>
    %23 = vector.extract_strided_slice %1 {offsets = [3, 0], sizes = [1, 128], strides = [1, 1]} : vector<8x128xf32> to vector<1x128xf32>
    %24 = vector.broadcast %22 : vector<8x1xf32> to vector<8x128xf32>
    %25 = vector.broadcast %23 : vector<1x128xf32> to vector<8x128xf32>
    %26 = arith.mulf %24, %25 : vector<8x128xf32>
    %27 = arith.addf %21, %26 : vector<8x128xf32>
    %cst = arith.constant 0.000000e+00 : f32
    %28 = vector.broadcast %cst : f32 to vector<8x128xf32>
    %29 = arith.maximumf %27, %28 : vector<8x128xf32>
    %30 = arith.truncf %29 : vector<8x128xf32> to vector<8x128xbf16>
    %c0_3 = arith.constant 0 : index
    %c0_4 = arith.constant 0 : index
    %31 = vector.load %arg3[%c0_3, %c0_4] : memref<128x128xbf16, #tpu.memory_space<vmem>>, vector<128x128xbf16>
    %cst_5 = arith.constant dense<0.000000e+00> : vector<8x128xf32>
    %32 = tpu.matmul %30, %31, %cst_5 {dimension_numbers = #tpu.dot_dimension_numbers<[1], [0], [0], [1], [0, 0, 1, 1], [], []>} : vector<8x128xbf16>, vector<128x128xbf16>, vector<8x128xf32> -> vector<8x128xf32>
    %33 = vector.extract_strided_slice %1 {offsets = [5, 0], sizes = [1, 128], strides = [1, 1]} : vector<8x128xf32> to vector<1x128xf32>
    %34 = vector.broadcast %33 : vector<1x128xf32> to vector<8x128xf32>
    %35 = arith.addf %32, %34 : vector<8x128xf32>
    %cst_6 = arith.constant 0.000000e+00 : f32
    %36 = vector.broadcast %cst_6 : f32 to vector<8x128xf32>
    %37 = arith.maximumf %35, %36 : vector<8x128xf32>
    %c0_7 = arith.constant 0 : index
    %c0_8 = arith.constant 0 : index
    %38 = vector.load %arg4[%c0_7, %c0_8] : memref<128x8xf32, #tpu.memory_space<vmem>>, vector<128x8xf32>
    %cst_9 = arith.constant dense<0.000000e+00> : vector<8x8xf32>
    %39 = tpu.matmul %37, %38, %cst_9 {dimension_numbers = #tpu.dot_dimension_numbers<[1], [0], [0], [1], [0, 0, 1, 1], [], []>} : vector<8x128xf32>, vector<128x8xf32>, vector<8x8xf32> -> vector<8x8xf32>
    %40 = vector.extract_strided_slice %1 {offsets = [6, 0], sizes = [1, 8], strides = [1, 1]} : vector<8x128xf32> to vector<1x8xf32>
    %41 = vector.broadcast %40 : vector<1x8xf32> to vector<8x8xf32>
    %42 = arith.addf %39, %41 : vector<8x8xf32>
    %c0_10 = arith.constant 0 : index
    %c0_11 = arith.constant 0 : index
    %43 = vector.load %arg5[%c0_10, %c0_11] : memref<8x8xf32, #tpu.memory_space<vmem>>, vector<8x8xf32>
    tpu.vector_store %arg5[%c0_10, %c0_11], %42 {strides = array<i32>} : memref<8x8xf32, #tpu.memory_space<vmem>>, vector<8x8xf32>,
    return
  }
  func.func @transform_0(%arg0: i32) -> (i32, i32) {
    %c0_i32 = arith.constant 0 : i32
    %c0_i32_0 = arith.constant 0 : i32
    return %arg0, %c0_i32 : i32, i32
  }
  func.func @transform_1(%arg0: i32) -> (i32, i32) {
    %c0_i32 = arith.constant 0 : i32
    %c0_i32_0 = arith.constant 0 : i32
    %c0_i32_1 = arith.constant 0 : i32
    return %c0_i32, %c0_i32_0 : i32, i32
  }
  func.func @transform_2(%arg0: i32) -> (i32, i32) {
    %c0_i32 = arith.constant 0 : i32
    %c0_i32_0 = arith.constant 0 : i32
    %c0_i32_1 = arith.constant 0 : i32
    return %c0_i32, %c0_i32_0 : i32, i32
  }
  func.func @transform_3(%arg0: i32) -> (i32, i32) {
    %c0_i32 = arith.constant 0 : i32
    %c0_i32_0 = arith.constant 0 : i32
    %c0_i32_1 = arith.constant 0 : i32
    return %c0_i32, %c0_i32_0 : i32, i32
  }
  func.func @transform_4(%arg0: i32) -> (i32, i32) {
    %c0_i32 = arith.constant 0 : i32
    %c0_i32_0 = arith.constant 0 : i32
    return %arg0, %c0_i32 : i32, i32
  }
}

</mosaic_0001>

<llo_original>
// kernel: tpu_custom_call.1
$region0: #{tpu_custom_call.1}
  #allocation0 [shape = 'u32[]', space=smem, size = 0x4, offset = 0x4, fixed_abs, tag = 'smem constant byte address 0x4 - core index']
  #allocation1 [shape = 'u32[144,128]{1,0:T(1,128)}', space=vmem, size = 0x12000, scoped, tag = 'internal scratch']
  %s0 = inlined_call_operand.vmem [shape: f32[8,4], index: 0, kind: input, shape index: {}]
  %s1 = inlined_call_operand.vmem [shape: f32[8,128], index: 1, kind: input, shape index: {}]
  %s2 = inlined_call_operand.vmem [shape: bf16[128,128], index: 2, kind: input, shape index: {}]
  %s3 = inlined_call_operand.vmem [shape: f32[128,8], index: 3, kind: input, shape index: {}]
  %s4 = inlined_call_operand.hbm [shape: f32[8,8], index: 4, kind: output, shape index: {}]
  %s5 = sld [smem:[#allocation0]]
  $region26: #{tpu_custom_call.1} parent=0
    _
  %s7 = ssub.s32 1, %s5
  %s8 = scalar_select 0, %s7, %s5
  $region1: #{tpu_custom_call.1} parent=0
    #allocation2 [shape = 'u8[4096]{0}', space=vmem, size = 0x1000, scoped, tag = 'output window, operand 0, single buffered']
    #allocation3 [shape = 's32[1]{0}', space=sflag, size = 0x4, scoped, tag = 'scoped memory for tpu_custom_call.1']
    %9 = vsyncpa [#allocation3], 0
    // Predicated region
    $region2: #{tpu_custom_call.1} parent=1 // pred_check
      _
    $region3: #{tpu_custom_call.1} parent=1 // pred_check_branch
      %11 = sbr.rel (0) target = $region5
    $region4: #{tpu_custom_call.1} parent=1 // pred_region
      _
    $region5: #{tpu_custom_call.1} parent=1 // pred_fallthru
      _
    // Predicated region
    $region6: #{tpu_custom_call.1} parent=1 // pred_check
      _
    $region7: #{tpu_custom_call.1} parent=1 // pred_check_branch
      %13 = sbr.rel (0) target = $region9
    $region8: #{tpu_custom_call.1} parent=1 // pred_region
      _
    $region9: #{tpu_custom_call.1} parent=1 // pred_fallthru
      _
    // Predicated region
    $region10: #{tpu_custom_call.1} parent=1 // pred_check
      _
    $region11: #{tpu_custom_call.1} parent=1 // pred_check_branch
      %15 = sbr.rel (0) target = $region13
    $region12: #{tpu_custom_call.1} parent=1 // pred_region
      _
    $region13: #{tpu_custom_call.1} parent=1 // pred_fallthru
      _
    // Predicated region
    $region14: #{tpu_custom_call.1} parent=1 // pred_check
      _
    $region15: #{tpu_custom_call.1} parent=1 // pred_check_branch
      %17 = sbr.rel (0) target = $region17
    $region16: #{tpu_custom_call.1} parent=1 // pred_region
      _
    $region17: #{tpu_custom_call.1} parent=1 // pred_fallthru
      _
    %v19 = vld [vmem:[%s0] sm:$0xff]
    %v20 = vld [vmem:[%s1] sm:$0xff]
    %22 = vset.pattern.permute.xlu0 0
    %23 = vperm.xlu0 %22, %v19
    %v24 = vpop.permute.xlu0 %23
    %v26 = vlaneseq
    %v27 = vshrl.u32 %v26, 7
    %v28 = vsub.s32 0, %v27
    %v29 = vrot.slane %v20, %v28
    %v30 = vmul.f32 %v24, %v29
    %v31 = vlaneseq
    %v32 = vshrl.u32 %v31, 7
    %v33 = vsub.s32 4, %v32
    %v34 = vrot.slane %v20, %v33
    %v35 = vadd.f32 %v34, %v30
    %36 = vset.pattern.permute.xlu0 1
    %37 = vperm.xlu0 %36, %v19
    %v38 = vpop.permute.xlu0 %37
    %v40 = vlaneseq
    %v41 = vshrl.u32 %v40, 7
    %v42 = vsub.s32 1, %v41
    %v43 = vrot.slane %v20, %v42
    %v44 = vmul.f32 %v38, %v43
    %v45 = vadd.f32 %v35, %v44
    %46 = vset.pattern.permute.xlu0 2
    %47 = vperm.xlu0 %46, %v19
    %v48 = vpop.permute.xlu0 %47
    %v50 = vlaneseq
    %v51 = vshrl.u32 %v50, 7
    %v52 = vsub.s32 2, %v51
    %v53 = vrot.slane %v20, %v52
    %v54 = vmul.f32 %v48, %v53
    %v55 = vadd.f32 %v45, %v54
    %56 = vset.pattern.permute.xlu0 3
    %57 = vperm.xlu0 %56, %v19
    %v58 = vpop.permute.xlu0 %57
    %v60 = vlaneseq
    %v61 = vshrl.u32 %v60, 7
    %v62 = vsub.s32 3, %v61
    %v63 = vrot.slane %v20, %v62
    %v64 = vmul.f32 %v58, %v63
    %v65 = vadd.f32 %v55, %v64
    %v66 = vmax.f32 %v65, 0.0
    %v67 = vpack.c.bf16 %v66, %v66
    %v68 = vld [vmem:[%s2] sm:$0xf]
    %v69 = vld [vmem:[%s2 + $0x4] sm:$0xf]
    %v70 = vld [vmem:[%s2 + $0x8] sm:$0xf]
    %v71 = vld [vmem:[%s2 + $0xc] sm:$0xf]
    %v72 = vld [vmem:[%s2 + $0x10] sm:$0xf]
    %v73 = vld [vmem:[%s2 + $0x14] sm:$0xf]
    %v74 = vld [vmem:[%s2 + $0x18] sm:$0xf]
    %v75 = vld [vmem:[%s2 + $0x1c] sm:$0xf]
    %v76 = vld [vmem:[%s2 + $0x20] sm:$0xf]
    %v77 = vld [vmem:[%s2 + $0x24] sm:$0xf]
    %v78 = vld [vmem:[%s2 + $0x28] sm:$0xf]
    %v79 = vld [vmem:[%s2 + $0x2c] sm:$0xf]
    %v80 = vld [vmem:[%s2 + $0x30] sm:$0xf]
    %v81 = vld [vmem:[%s2 + $0x34] sm:$0xf]
    %v82 = vld [vmem:[%s2 + $0x38] sm:$0xf]
    %v83 = vld [vmem:[%s2 + $0x3c] sm:$0xf]
    %v84 = vlaneseq
    %v85 = vshrl.u32 %v84, 7
    %v86 = vsub.s32 5, %v85
    %v87 = vrot.slane %v20, %v86
    %v104 = vunpack.c.l.b16 %v68
    %v105 = vunpack.c.l.b16 %v69
    %v106 = vunpack.c.l.b16 %v70
    %v107 = vunpack.c.l.b16 %v71
    %v108 = vunpack.c.l.b16 %v72
    %v109 = vunpack.c.l.b16 %v73
    %v110 = vunpack.c.l.b16 %v74
    %v111 = vunpack.c.l.b16 %v75
    %v112 = vunpack.c.l.b16 %v76
    %v113 = vunpack.c.l.b16 %v77
    %v114 = vunpack.c.l.b16 %v78
    %v115 = vunpack.c.l.b16 %v79
    %v116 = vunpack.c.l.b16 %v80
    %v117 = vunpack.c.l.b16 %v81
    %v118 = vunpack.c.l.b16 %v82
    %v119 = vunpack.c.l.b16 %v83
    %v120 = vpack.c.b16 %v105, %v104
    %v121 = vpack.c.b16 %v107, %v106
    %v122 = vpack.c.b16 %v109, %v108
    %v123 = vpack.c.b16 %v111, %v110
    %v124 = vpack.c.b16 %v113, %v112
    %v125 = vpack.c.b16 %v115, %v114
    %v126 = vpack.c.b16 %v117, %v116
    %v127 = vpack.c.b16 %v119, %v118
    %136 = vmatprep.subr.bf16.mxu0 0
    %137 = vmatpush1.bf16.msra.mxu0 %v120
    %138 = vmatprep.subr.bf16.mxu0 0
    %139 = vmatpush1.bf16.msra.mxu0 %v121
    %140 = vmatprep.subr.bf16.mxu0 0
    %141 = vmatpush1.bf16.msra.mxu0 %v122
    %142 = vmatprep.subr.bf16.mxu0 0
    %143 = vmatpush1.bf16.msra.mxu0 %v123
    %144 = vmatprep.subr.bf16.mxu0 0
    %145 = vmatpush1.bf16.msra.mxu0 %v124
    %146 = vmatprep.subr.bf16.mxu0 0
    %147 = vmatpush1.bf16.msra.mxu0 %v125
    %148 = vmatprep.subr.bf16.mxu0 0
    %149 = vmatpush1.bf16.msra.mxu0 %v126
    %150 = vmatprep.subr.bf16.mxu0 0
    %151 = vmatpush1.bf16.msra.mxu0 %v127
    %152 = vmatprep.subr.bf16.mxu0 0
    %153 = vmatpush1.bf16.msra.mxu0 0
    %154 = vmatprep.subr.bf16.mxu0 0
    %155 = vmatpush1.bf16.msra.mxu0 0
    %156 = vmatprep.subr.bf16.mxu0 0
    %157 = vmatpush1.bf16.msra.mxu0 0
    %158 = vmatprep.subr.bf16.mxu0 0
    %159 = vmatpush1.bf16.msra.mxu0 0
    %160 = vmatprep.subr.bf16.mxu0 0
    %161 = vmatpush1.bf16.msra.mxu0 0
    %162 = vmatprep.subr.bf16.mxu0 0
    %163 = vmatpush1.bf16.msra.mxu0 0
    %164 = vmatprep.subr.bf16.mxu0 0
    %165 = vmatpush1.bf16.msra.mxu0 0
    %166 = vmatprep.subr.bf16.mxu0 0
    %167 = vmatpush1.bf16.msra.mxu0 0
    %168 = vmatprep.mubr.bf16.mxu0 0
    %169 = vmatmul.mubr.bf16.gmra.mrb[0].mxu0 %v67
    %v170 = vpop.f32.mrb[0].mxu0
    %v171 = vadd.f32 %v87, %v170
    %v172 = vpop.f32.mrb[0].mxu0
    %v173 = vpop.f32.mrb[0].mxu0
    %v174 = vpop.f32.mrb[0].mxu0
    %175 = vdwg.mxu0
    %v176 = vmax.f32 %v171, 0.0
    %v177 = vld [vmem:[%s3] sm:$0xff]
    %v178 = vld [vmem:[%s3 + $0x8] sm:$0xff]
    %v179 = vld [vmem:[%s3 + $0x10] sm:$0xff]
    %v180 = vld [vmem:[%s3 + $0x18] sm:$0xff]
    %v181 = vld [vmem:[%s3 + $0x20] sm:$0xff]
    %v182 = vld [vmem:[%s3 + $0x28] sm:$0xff]
    %v183 = vld [vmem:[%s3 + $0x30] sm:$0xff]
    %v184 = vld [vmem:[%s3 + $0x38] sm:$0xff]
    %v185 = vld [vmem:[%s3 + $0x40] sm:$0xff]
    %v186 = vld [vmem:[%s3 + $0x48] sm:$0xff]
    %v187 = vld [vmem:[%s3 + $0x50] sm:$0xff]
    %v188 = vld [vmem:[%s3 + $0x58] sm:$0xff]
    %v189 = vld [vmem:[%s3 + $0x60] sm:$0xff]
    %v190 = vld [vmem:[%s3 + $0x68] sm:$0xff]
    %v191 = vld [vmem:[%s3 + $0x70] sm:$0xff]
    %v192 = vld [vmem:[%s3 + $0x78] sm:$0xff]
    %v193 = vlaneseq
    %v194 = vshrl.u32 %v193, 7
    %v195 = vsub.s32 6, %v194
    %v196 = vrot.slane %v20, %v195
    %197 = vmatprep.subr.mxu0 0.0
    %198 = vmatpush1.msra.mxu0 %v177
    %199 = vmatprep.subr.mxu0 0.0
    %200 = vmatpush1.msra.mxu0 %v178
    %201 = vmatprep.subr.mxu0 0.0
    %202 = vmatpush1.msra.mxu0 %v179
    %203 = vmatprep.subr.mxu0 0.0
    %204 = vmatpush1.msra.mxu0 %v180
    %205 = vmatprep.subr.mxu0 0.0
    %206 = vmatpush1.msra.mxu0 %v181
    %207 = vmatprep.subr.mxu0 0.0
    %208 = vmatpush1.msra.mxu0 %v182
    %209 = vmatprep.subr.mxu0 0.0
    %210 = vmatpush1.msra.mxu0 %v183
    %211 = vmatprep.subr.mxu0 0.0
    %212 = vmatpush1.msra.mxu0 %v184
    %213 = vmatprep.subr.mxu0 0.0
    %214 = vmatpush1.msra.mxu0 %v185
    %215 = vmatprep.subr.mxu0 0.0
    %216 = vmatpush1.msra.mxu0 %v186
    %217 = vmatprep.subr.mxu0 0.0
    %218 = vmatpush1.msra.mxu0 %v187
    %219 = vmatprep.subr.mxu0 0.0
    %220 = vmatpush1.msra.mxu0 %v188
    %221 = vmatprep.subr.mxu0 0.0
    %222 = vmatpush1.msra.mxu0 %v189
    %223 = vmatprep.subr.mxu0 0.0
    %224 = vmatpush1.msra.mxu0 %v190
    %225 = vmatprep.subr.mxu0 0.0
    %226 = vmatpush1.msra.mxu0 %v191
    %227 = vmatprep.subr.mxu0 0.0
    %228 = vmatpush1.msra.mxu0 %v192
    %229 = vmatprep.subr.mxu0 0.0
    %230 = vmatpush1.msra.mxu0 0.0
    %231 = vmatprep.subr.mxu0 0.0
    %232 = vmatpush1.msra.mxu0 0.0
    %233 = vmatprep.subr.mxu0 0.0
    %234 = vmatpush1.msra.mxu0 0.0
    %235 = vmatprep.subr.mxu0 0.0
    %236 = vmatpush1.msra.mxu0 0.0
    %237 = vmatprep.subr.mxu0 0.0
    %238 = vmatpush1.msra.mxu0 0.0
    %239 = vmatprep.subr.mxu0 0.0
    %240 = vmatpush1.msra.mxu0 0.0
    %241 = vmatprep.subr.mxu0 0.0
    %242 = vmatpush1.msra.mxu0 0.0
    %243 = vmatprep.subr.mxu0 0.0
    %244 = vmatpush1.msra.mxu0 0.0
    %245 = vmatprep.subr.mxu0 0.0
    %246 = vmatpush1.msra.mxu0 0.0
    %247 = vmatprep.subr.mxu0 0.0
    %248 = vmatpush1.msra.mxu0 0.0
    %249 = vmatprep.subr.mxu0 0.0
    %250 = vmatpush1.msra.mxu0 0.0
    %251 = vmatprep.subr.mxu0 0.0
    %252 = vmatpush1.msra.mxu0 0.0
    %253 = vmatprep.subr.mxu0 0.0
    %254 = vmatpush1.msra.mxu0 0.0
    %255 = vmatprep.subr.mxu0 0.0
    %256 = vmatpush1.msra.mxu0 0.0
    %257 = vmatprep.subr.mxu0 0.0
    %258 = vmatpush1.msra.mxu0 0.0
    %259 = vmatprep.subr.mxu0 0.0
    %260 = vmatpush1.msra.mxu0 0.0
    %261 = vmatprep.mubr.f32.mxu0 0.0
    %262 = vmatmul.mubr.f32.gmra.mrb[0].mxu0 %v176
    %v263 = vpop.f32.mrb[0].mxu0
    %v264 = vadd.f32 %v196, %v263
    %v265 = vpop.f32.mrb[0].mxu0
    %266 = vdwg.mxu0
    %vm267 = vcmask 64512
    %268 = vst.msk [vmem:[#allocation2] sm:$0xff] %vm267, %v264
    // Predicated region
    $region18: #{tpu_custom_call.1} parent=1 // pred_check
      _
    $region19: #{tpu_custom_call.1} parent=1 // pred_check_branch
      %270 = sbr.rel (0) target = $region21
    $region20: #{tpu_custom_call.1} parent=1 // pred_region
      %s272 = ssub.s32 128, 128
      %273 = vsyncadd [#allocation3], %s272
      %s275 = sshll.u32 [#allocation2], 4
      %s276 = int_to_ptr.vmem [resolvable:$true] %s275
      %278 = dma.vmem_to_hbm [thread:$0]  %s276, 128, %s4, [#allocation3]
    $region21: #{tpu_custom_call.1} parent=1 // pred_fallthru
      _
    // Predicated region
    $region22: #{tpu_custom_call.1} parent=1 // pred_check
      _
    $region23: #{tpu_custom_call.1} parent=1 // pred_check_branch
      %280 = sbr.rel (0) target = $region25
    $region24: #{tpu_custom_call.1} parent=1 // pred_region
      %281 = dma.done [#allocation3], 128
    $region25: #{tpu_custom_call.1} parent=1 // pred_fallthru
      _
    %282 = vsyncpa [#allocation3], 1

</llo_original>
